<compile_context>
chip_gen: v6e
topology: v6e:2x2x1
jax: 0.10.0
libtpu: 0.0.40
codegen_flags: <defaults>
</compile_context>

<pallas_src>
from functools import partial

import jax
import jax.numpy as jnp
from jax.experimental import pallas as pl
from jax.experimental.pallas import tpu as pltpu


_SCALAR_REMAP_MAX = 48            # max cout*cin handled by in-kernel scalar MACs
_TARGET_IN_TILE_BYTES = 8 << 20   # per-step input DMA target (~8 MiB)
_VMEM_CAP_BYTES = 48 << 20        # <= 75% of v7x's 64 MiB physical VMEM
_TARGET_POOLED_CHUNK = 256        # pooled lane-chunk width target (mult. of 128)
_ROW_BLOCK_CAP = 128              # cap on output rows per block (H-pool ~ th^2)
_MIN_GRID_BLOCKS = 4              # >= 2 TCs (v7x) x 2 so blocks can shard/pipeline


# ---------------------------------------------------------------------------
# Host-side helpers
# ---------------------------------------------------------------------------
def _pool_matrix(size_in, factor, dtype):
    """(size_in, size_in // factor) matrix P with x @ P == block-mean pooling.

    Repeated bilinear x0.5 (align_corners=False) on even sizes averages
    adjacent pairs, so n stages == uniform mean over 2**n blocks (weights
    1/2**n, exactly representable in bf16 and f32).
    """
    size_out = size_in // factor
    rows = jnp.arange(size_in)[:, None]
    cols = jnp.arange(size_out)[None, :]
    return jnp.where(rows // factor == cols, 1.0 / factor, 0.0).astype(dtype)


def _choose_row_block(hp, n, c, w, f, itemsize):
    """Output rows per grid block.

    Largest multiple-of-8 divisor of H' (capped) whose input tile stays under
    the per-step DMA target; then shrunk if needed so the grid has at least
    _MIN_GRID_BLOCKS steps (v7x 2-TC sharding / pipelining).  Falls back to a
    single H' block for awkward sizes (correctness first)."""
    cands = [d for d in range(8, hp + 1, 8) if hp % d == 0 and d <= _ROW_BLOCK_CAP]
    if not cands:
        return hp
    fit = [d for d in cands if c * d * f * w * itemsize <= _TARGET_IN_TILE_BYTES]
    th = max(fit) if fit else min(cands)
    while n * (hp // th) < _MIN_GRID_BLOCKS:
        smaller = [d for d in cands if d < th]
        if not smaller:
            break
        th = max(smaller)
    return th


def _choose_w_chunk(w, f):
    """Input-width chunk TW (divides W, multiple of f) for the block-diagonal
    W pooling.  Prefers pooled chunk widths that are multiples of 128 so every
    output store is lane-aligned / unmasked."""
    wp = w // f
    if wp <= _TARGET_POOLED_CHUNK:
        return w
    hi = 2 * _TARGET_POOLED_CHUNK
    aligned = [d for d in range(128, hi + 1, 128) if wp % d == 0]
    if aligned:
        good = [d for d in aligned if d <= _TARGET_POOLED_CHUNK]
        return (max(good) if good else min(aligned)) * f
    unaligned = [d for d in range(32, hi + 1) if wp % d == 0]
    if unaligned:
        return min(unaligned, key=lambda d: abs(d - _TARGET_POOLED_CHUNK)) * f
    return w


# ---------------------------------------------------------------------------
# Forward (single jitted computation: constants + pallas_call + optional remap)
# ---------------------------------------------------------------------------
def _spatial_rescale(x, wmap, *, n_stages):
    n, c, h, w = x.shape
    f = 2 ** n_stages
    if h % f != 0 or w % f != 0:
        raise ValueError("spatial dims must be divisible by 2**n_stages")
    out_dtype = x.dtype
    cout_full = c if wmap is None else wmap.shape[0]

    if f == 1:  # n_stages == 0: no resizing, optional channel remap only.
        if wmap is None:
            return x
        return jnp.einsum('oc,nchw->nohw', wmap,
                          x.astype(jnp.float32)).astype(out_dtype)

    hp, wp = h // f, w // f
    # Compute dtype follows the input: exact f32 for f32 callers (HBM-bound,
    # so f32 MXU matmuls are ~free on v6e/v7x), bf16 for bf16 callers.
    cdt = jnp.bfloat16 if x.dtype == jnp.bfloat16 else jnp.float32
    itemsize = jnp.dtype(x.dtype).itemsize

    # ---- tiling policy ------------------------------------------------------
    th = _choose_row_block(hp, n, c, w, f, itemsize)   # output rows per block
    th_in = th * f                                     # input rows per block
    p = th
    p_pad = max(8, -(-p // 8) * 8)                     # sublane-align pooled rows
    tw = _choose_w_chunk(w, f)                         # input lane chunk
    twp = tw // f                                      # pooled lane chunk
    n_chunks = w // tw
    grid = (n, hp // th)

    # In-kernel channel remap only for small cout*cin (scalar SMEM MACs); a
    # channel contraction on an NCHW tile otherwise needs a major-dim relayout
    # inside the kernel, so large remaps run as one fused XLA contraction on
    # the f^2-smaller pooled tensor instead.
    remap_in_kernel = wmap is not None and cout_full * c <= _SCALAR_REMAP_MAX
    cout = cout_full if remap_in_kernel else c

    # ---- pooling matrices (block-mean weights 1/f, exact in bf16/f32) -------
    pht_t = _pool_matrix(th_in, f, cdt).T              # (p, th_in)
    if p_pad != p:
        pht_t = jnp.pad(pht_t, ((0, p_pad - p), (0, 0)))
    pw_blk = _pool_matrix(tw, f, cdt)                  # (tw, twp) shared block

    # ---- kernel bodies -------------------------------------------------------
    def pool_chunk(x_ref, pht_b, pw, j):
        xc = x_ref[:, :, pl.ds(j * tw, tw)].astype(cdt)          # (C, TH_in, TW)
        # H pooling: per-channel (P, TH_in) @ (TH_in, TW), batched over C on
        # the MXU.  Emits cdt directly (bf16 path keeps the intermediate small).
        u = jnp.einsum('cph,chw->cpw', pht_b, xc,
                       preferred_element_type=cdt)               # (C, P_pad, TW)
        # W pooling: one 2-D MXU matmul of the flattened (C*P_pad, TW) view
        # against the shared block-diagonal block, f32 accumulation.
        t = jnp.dot(u.reshape(c * p_pad, tw), pw,
                    preferred_element_type=jnp.float32)          # (C*P_pad, TWp)
        t = t.reshape(c, p_pad, twp)
        if p_pad != p:
            t = t[:, :p, :]                                      # drop pad rows
        return t                                                 # (C, P, TWp) f32

    def pool_kernel(x_ref, pht_ref, pw_ref, o_ref):
        # Hoisted out of the chunk loop (JAX does not CSE broadcast_in_dim).
        pht_b = jnp.broadcast_to(pht_ref[...][None], (c, p_pad, th_in))
        pw = pw_ref[...]
        for j in range(n_chunks):                                # static unroll
            t = pool_chunk(x_ref, pht_b, pw, j)
            o_ref[:, :, pl.ds(j * twp, twp)] = t.astype(o_ref.dtype)

    def pool_remap_kernel(x_ref, pht_ref, pw_ref, wmap_ref, o_ref):
        pht_b = jnp.broadcast_to(pht_ref[...][None], (c, p_pad, th_in))
        pw = pw_ref[...]
        for j in range(n_chunks):                                # static unroll
            t = pool_chunk(x_ref, pht_b, pw, j)
            # 1x1-conv remap on the pooled chunk: unrolled scalar-weight MACs
            # (weights in SMEM) -- cheap, exact f32 for small cout*cin.
            for o in range(cout):
                acc = wmap_ref[o, 0] * t[0]
                for ch in range(1, c):
                    acc = acc + wmap_ref[o, ch] * t[ch]
                o_ref[o, :, pl.ds(j * twp, twp)] = acc.astype(o_ref.dtype)

    # ---- specs / VMEM budget -------------------------------------------------
    x_spec = pl.BlockSpec((pl.Squeezed(), c, th_in, w), lambda b, i: (b, 0, i, 0))
    pht_spec = pl.BlockSpec((p_pad, th_in), lambda b, i: (0, 0))
    pw_spec = pl.BlockSpec((tw, twp), lambda b, i: (0, 0))
    out_spec = pl.BlockSpec((pl.Squeezed(), cout, th, wp), lambda b, i: (b, 0, i, 0))

    out_isize = jnp.dtype(out_dtype).itemsize
    cdt_size = jnp.dtype(cdt).itemsize
    need = (2 * c * th_in * w * itemsize                 # input block, 2x buffered
            + 2 * cout * th * wp * out_isize             # output block, 2x buffered
            + 2 * (p_pad * th_in + tw * twp) * cdt_size  # pool matrices, 2x buffered
            + c * p_pad * th_in * cdt_size               # broadcast H-pool matrix
            + c * th_in * tw * cdt_size                  # x chunk in compute dtype
            + c * p_pad * tw * cdt_size                  # H-pooled chunk
            + 2 * c * p_pad * twp * 4)                   # W-pooled chunk + remap acc
    vmem_limit = int(max(24 << 20,
                         min(_VMEM_CAP_BYTES, 2 * need),
                         need + (4 << 20)))

    if remap_in_kernel:
        kernel = pool_remap_kernel
        in_specs = [x_spec, pht_spec, pw_spec,
                    pl.BlockSpec(memory_space=pltpu.MemorySpace.SMEM)]
        operands = (x, pht_t, pw_blk, wmap.astype(jnp.float32))
    else:
        kernel = pool_kernel
        in_specs = [x_spec, pht_spec, pw_spec]
        operands = (x, pht_t, pw_blk)

    pooled = pl.pallas_call(
        kernel,
        out_shape=jax.ShapeDtypeStruct((n, cout, hp, wp), out_dtype),
        grid_spec=pltpu.PrefetchScalarGridSpec(
            num_scalar_prefetch=0,
            grid=grid,
            in_specs=in_specs,
            out_specs=out_spec),
        compiler_params=pltpu.CompilerParams(
            dimension_semantics=("parallel", "parallel"),
            vmem_limit_bytes=vmem_limit),
    )(*operands)

    if wmap is not None and not remap_in_kernel:
        # Large channel remap: one XLA MXU contraction on the pooled (f^2-times
        # smaller) tensor, fused under the same jit.
        pooled = jnp.einsum('oc,nchw->nohw', wmap,
                            pooled.astype(jnp.float32)).astype(out_dtype)
    return pooled


# ---------------------------------------------------------------------------
# Module
# ---------------------------------------------------------------------------
class SpatialRescalerPallas:
    """Pallas equivalent of ldm SpatialRescaler (bilinear, multiplier=0.5)."""

    def __init__(self, n_stages=1, method='bilinear', multiplier=0.5,
                 in_channels=3, out_channels=None, bias=False, key=None):
        assert n_stages >= 0
        # TODO(synk): other interpolation modes / arbitrary multipliers and a
        # conv bias are not implemented; only the module-default bilinear
        # x0.5, bias=False path is translated.
        assert method == 'bilinear', "only 'bilinear' implemented"
        assert multiplier == 0.5, "only multiplier=0.5 implemented"
        assert not bias, "bias=False only (module default)"
        self.n_stages = n_stages
        self.in_channels = in_channels
        self.remap_output = out_channels is not None
        self.out_channels = out_channels if self.remap_output else in_channels
        if self.remap_output:
            # nn.Conv2d(in_channels, out_channels, 1, bias=False) weight,
            # deterministic uniform(-1/sqrt(Cin), 1/sqrt(Cin)) init.
            key = jax.random.PRNGKey(42) if key is None else key
            bound = 1.0 / float(in_channels) ** 0.5
            self.wmap = jax.random.uniform(
                key, (out_channels, in_channels), jnp.float32, -bound, bound)
        else:
            self.wmap = None
        # One jitted forward: constants, pallas_call and any host-side remap
        # live in a single XLA computation (cached per input shape/dtype).
        self._fwd = jax.jit(partial(_spatial_rescale, n_stages=n_stages))

    def __call__(self, x):
        assert x.shape[1] == self.in_channels
        return self._fwd(x, self.wmap)

    def encode(self, x):
        return self(x)


# ---------------------------------------------------------------------------
# Reference + test
# ---------------------------------------------------------------------------
def _reference(x, n_stages, wmap):
    """Pure-jnp reference: repeated 2x2 mean pooling + optional 1x1 conv."""
    f = 2 ** n_stages
    n, c, h, w = x.shape
    xf = x.astype(jnp.float32)
    pooled = xf.reshape(n, c, h // f, f, w // f, f).mean(axis=(3, 5))
    if wmap is not None:
        pooled = jnp.einsum('oc,nchw->nohw', wmap, pooled)
    return pooled


def _check(name, out, ref, atol, rtol):
    if not jnp.allclose(out.astype(jnp.float32), ref, atol=atol, rtol=rtol):
        err = float(jnp.max(jnp.abs(out.astype(jnp.float32) - ref)))
        raise AssertionError(f"{name} mismatch (max abs err {err})")


if __name__ == "__main__":
    key = jax.random.PRNGKey(0)
    kx, kw1, kw3 = jax.random.split(key, 3)

    N, C, H, W = 2, 3, 16, 16
    x = jax.random.normal(kx, (N, C, H, W), dtype=jnp.float32)

    # Path 1: one stage + small 1x1-conv remap (in-kernel scalar-MAC remap).
    m1 = SpatialRescalerPallas(n_stages=1, method='bilinear', multiplier=0.5,
                               in_channels=C, out_channels=8, bias=False, key=kw1)
    out1 = jax.block_until_ready(m1(x))
    assert out1.shape == (N, 8, H // 2, W // 2), out1.shape
    _check("remap(small)", out1, _reference(x, 1, m1.wmap), 2e-2, 2e-2)

    # Path 2: two stages, no remap (exercises the sublane-padded H-pool rows).
    m2 = SpatialRescalerPallas(n_stages=2, in_channels=C, out_channels=None)
    out2 = jax.block_until_ready(m2(x))
    assert out2.shape == (N, C, H // 4, W // 4), out2.shape
    _check("plain(f=4)", out2, _reference(x, 2, None), 2e-2, 2e-2)

    # Path 3: one stage + large remap (host-side fused MXU contraction path).
    m3 = SpatialRescalerPallas(n_stages=1, in_channels=C, out_channels=32, key=kw3)
    out3 = jax.block_until_ready(m3(x))
    assert out3.shape == (N, 32, H // 2, W // 2), out3.shape
    _check("remap(large)", out3, _reference(x, 1, m3.wmap), 2e-2, 2e-2)

    # Path 4: bf16 input, one stage, no remap (bf16 MXU path).
    x_bf16 = x.astype(jnp.bfloat16)
    m4 = SpatialRescalerPallas(n_stages=1, in_channels=C, out_channels=None)
    out4 = jax.block_until_ready(m4(x_bf16))
    assert out4.shape == (N, C, H // 2, W // 2), out4.shape
    assert out4.dtype == jnp.bfloat16
    _check("plain(bf16)", out4, _reference(x_bf16, 1, None), 5e-2, 5e-2)

    print("KERNEL_OK")
</pallas_src>

<mosaic_0001>
module attributes {stable_mosaic.version = 11 : i64} {
  func.func @pool_remap_kernel(%arg0: i32, %arg1: i32, %arg2: memref<1x3x16x16xf32, #tpu.memory_space<vmem>>, %arg3: memref<8x16xf32, #tpu.memory_space<vmem>>, %arg4: memref<16x8xf32, #tpu.memory_space<vmem>>, %arg5: memref<8x3xf32, #tpu.memory_space<smem>>, %arg6: memref<1x8x8x8xf32, #tpu.memory_space<vmem>>) attributes {dimension_semantics = [#tpu.dimension_semantics<parallel>, #tpu.dimension_semantics<parallel>], iteration_bounds = array<i64: 2, 1>, scalar_prefetch = 0 : i64, scratch_operands = 0 : i64, tpu.core_type = #tpu.core_type<tc>, window_params = [{transform_indices = @transform_0, window_bounds = array<i64: 1, 3, 16, 16>}, {pipeline_mode = #tpu.pipeline_mode<synchronous>, transform_indices = @transform_1, window_bounds = array<i64: 8, 16>}, {pipeline_mode = #tpu.pipeline_mode<synchronous>, transform_indices = @transform_2, window_bounds = array<i64: 16, 8>}, {transform_indices = @transform_3, window_bounds = array<i64: 8, 3>}, {transform_indices = @transform_4, window_bounds = array<i64: 1, 8, 8, 8>}]} {
    %c0 = arith.constant 0 : index
    %c0_0 = arith.constant 0 : index
    %0 = vector.load %arg3[%c0, %c0_0] : memref<8x16xf32, #tpu.memory_space<vmem>>, vector<8x16xf32>
    %1 = vector.shape_cast %0 : vector<8x16xf32> to vector<1x8x16xf32>
    %2 = vector.shape_cast %1 : vector<1x8x16xf32> to vector<1x8x16xf32>
    %3 = vector.broadcast %2 : vector<1x8x16xf32> to vector<3x8x16xf32>
    %c0_1 = arith.constant 0 : index
    %c0_2 = arith.constant 0 : index
    %4 = vector.load %arg4[%c0_1, %c0_2] : memref<16x8xf32, #tpu.memory_space<vmem>>, vector<16x8xf32>
    %c0_3 = arith.constant 0 : index
    %c0_4 = arith.constant 0 : index
    %c0_5 = arith.constant 0 : index
    %c0_6 = arith.constant 0 : index
    %5 = vector.load %arg2[%c0_3, %c0_4, %c0_5, %c0_6] : memref<1x3x16x16xf32, #tpu.memory_space<vmem>>, vector<1x3x16x16xf32>
    %6 = vector.shape_cast %5 : vector<1x3x16x16xf32> to vector<3x16x16xf32>
    "tpu.trace_start"() <{level = 10 : i32, message = "cph,chw->cpw"}> : () -> ()
    %cst = arith.constant dense<0.000000e+00> : vector<3x8x16xf32>
    %7 = tpu.matmul %3, %6, %cst {dimension_numbers = #tpu.dot_dimension_numbers<[2], [1], [1], [2], [0, 0, 0, 1, 1, 2], [0], [0]>} : vector<3x8x16xf32>, vector<3x16x16xf32>, vector<3x8x16xf32> -> vector<3x8x16xf32>
    "tpu.trace_stop"() : () -> ()
    %8 = vector.shape_cast %7 : vector<3x8x16xf32> to vector<24x16xf32>
    %cst_7 = arith.constant dense<0.000000e+00> : vector<24x8xf32>
    %9 = tpu.matmul %8, %4, %cst_7 {dimension_numbers = #tpu.dot_dimension_numbers<[1], [0], [0], [1], [0, 0, 1, 1], [], []>} : vector<24x16xf32>, vector<16x8xf32>, vector<24x8xf32> -> vector<24x8xf32>
    %10 = vector.shape_cast %9 : vector<24x8xf32> to vector<3x8x8xf32>
    %c0_8 = arith.constant 0 : index
    %c0_9 = arith.constant 0 : index
    %11 = memref.load %arg5[%c0_8, %c0_9] : memref<8x3xf32, #tpu.memory_space<smem>>
    %12 = vector.extract_strided_slice %10 {offsets = [0, 0, 0], sizes = [1, 8, 8], strides = [1, 1, 1]} : vector<3x8x8xf32> to vector<1x8x8xf32>
    %13 = vector.shape_cast %12 : vector<1x8x8xf32> to vector<8x8xf32>
    %14 = vector.broadcast %11 : f32 to vector<8x8xf32>
    %15 = arith.mulf %14, %13 : vector<8x8xf32>
    %c0_10 = arith.constant 0 : index
    %c1 = arith.constant 1 : index
    %16 = memref.load %arg5[%c0_10, %c1] : memref<8x3xf32, #tpu.memory_space<smem>>
    %17 = vector.extract_strided_slice %10 {offsets = [1, 0, 0], sizes = [1, 8, 8], strides = [1, 1, 1]} : vector<3x8x8xf32> to vector<1x8x8xf32>
    %18 = vector.shape_cast %17 : vector<1x8x8xf32> to vector<8x8xf32>
    %19 = vector.broadcast %16 : f32 to vector<8x8xf32>
    %20 = arith.mulf %19, %18 : vector<8x8xf32>
    %21 = arith.addf %15, %20 : vector<8x8xf32>
    %c0_11 = arith.constant 0 : index
    %c2 = arith.constant 2 : index
    %22 = memref.load %arg5[%c0_11, %c2] : memref<8x3xf32, #tpu.memory_space<smem>>
    %23 = vector.extract_strided_slice %10 {offsets = [2, 0, 0], sizes = [1, 8, 8], strides = [1, 1, 1]} : vector<3x8x8xf32> to vector<1x8x8xf32>
    %24 = vector.shape_cast %23 : vector<1x8x8xf32> to vector<8x8xf32>
    %25 = vector.broadcast %22 : f32 to vector<8x8xf32>
    %26 = arith.mulf %25, %24 : vector<8x8xf32>
    %27 = arith.addf %21, %26 : vector<8x8xf32>
    %c0_12 = arith.constant 0 : index
    %c0_13 = arith.constant 0 : index
    %c0_14 = arith.constant 0 : index
    %c0_15 = arith.constant 0 : index
    %28 = vector.load %arg6[%c0_12, %c0_13, %c0_14, %c0_15] : memref<1x8x8x8xf32, #tpu.memory_space<vmem>>, vector<1x1x8x8xf32>
    %29 = vector.shape_cast %28 : vector<1x1x8x8xf32> to vector<8x8xf32>
    %30 = vector.shape_cast %27 : vector<8x8xf32> to vector<1x1x8x8xf32>
    tpu.vector_store %arg6[%c0_12, %c0_13, %c0_14, %c0_15], %30 {strides = array<i32>} : memref<1x8x8x8xf32, #tpu.memory_space<vmem>>, vector<1x1x8x8xf32>,
    %c1_16 = arith.constant 1 : index
    %c0_17 = arith.constant 0 : index
    %31 = memref.load %arg5[%c1_16, %c0_17] : memref<8x3xf32, #tpu.memory_space<smem>>
    %32 = vector.extract_strided_slice %10 {offsets = [0, 0, 0], sizes = [1, 8, 8], strides = [1, 1, 1]} : vector<3x8x8xf32> to vector<1x8x8xf32>
    %33 = vector.shape_cast %32 : vector<1x8x8xf32> to vector<8x8xf32>
    %34 = vector.broadcast %31 : f32 to vector<8x8xf32>
    %35 = arith.mulf %34, %33 : vector<8x8xf32>
    %c1_18 = arith.constant 1 : index
    %c1_19 = arith.constant 1 : index
    %36 = memref.load %arg5[%c1_18, %c1_19] : memref<8x3xf32, #tpu.memory_space<smem>>
    %37 = vector.extract_strided_slice %10 {offsets = [1, 0, 0], sizes = [1, 8, 8], strides = [1, 1, 1]} : vector<3x8x8xf32> to vector<1x8x8xf32>
    %38 = vector.shape_cast %37 : vector<1x8x8xf32> to vector<8x8xf32>
    %39 = vector.broadcast %36 : f32 to vector<8x8xf32>
    %40 = arith.mulf %39, %38 : vector<8x8xf32>
    %41 = arith.addf %35, %40 : vector<8x8xf32>
    %c1_20 = arith.constant 1 : index
    %c2_21 = arith.constant 2 : index
    %42 = memref.load %arg5[%c1_20, %c2_21] : memref<8x3xf32, #tpu.memory_space<smem>>
    %43 = vector.extract_strided_slice %10 {offsets = [2, 0, 0], sizes = [1, 8, 8], strides = [1, 1, 1]} : vector<3x8x8xf32> to vector<1x8x8xf32>
    %44 = vector.shape_cast %43 : vector<1x8x8xf32> to vector<8x8xf32>
    %45 = vector.broadcast %42 : f32 to vector<8x8xf32>
    %46 = arith.mulf %45, %44 : vector<8x8xf32>
    %47 = arith.addf %41, %46 : vector<8x8xf32>
    %c0_22 = arith.constant 0 : index
    %c1_23 = arith.constant 1 : index
    %c0_24 = arith.constant 0 : index
    %c0_25 = arith.constant 0 : index
    %48 = vector.load %arg6[%c0_22, %c1_23, %c0_24, %c0_25] : memref<1x8x8x8xf32, #tpu.memory_space<vmem>>, vector<1x1x8x8xf32>
    %49 = vector.shape_cast %48 : vector<1x1x8x8xf32> to vector<8x8xf32>
    %50 = vector.shape_cast %47 : vector<8x8xf32> to vector<1x1x8x8xf32>
    tpu.vector_store %arg6[%c0_22, %c1_23, %c0_24, %c0_25], %50 {strides = array<i32>} : memref<1x8x8x8xf32, #tpu.memory_space<vmem>>, vector<1x1x8x8xf32>,
    %c2_26 = arith.constant 2 : index
    %c0_27 = arith.constant 0 : index
    %51 = memref.load %arg5[%c2_26, %c0_27] : memref<8x3xf32, #tpu.memory_space<smem>>
    %52 = vector.extract_strided_slice %10 {offsets = [0, 0, 0], sizes = [1, 8, 8], strides = [1, 1, 1]} : vector<3x8x8xf32> to vector<1x8x8xf32>
    %53 = vector.shape_cast %52 : vector<1x8x8xf32> to vector<8x8xf32>
    %54 = vector.broadcast %51 : f32 to vector<8x8xf32>
    %55 = arith.mulf %54, %53 : vector<8x8xf32>
    %c2_28 = arith.constant 2 : index
    %c1_29 = arith.constant 1 : index
    %56 = memref.load %arg5[%c2_28, %c1_29] : memref<8x3xf32, #tpu.memory_space<smem>>
    %57 = vector.extract_strided_slice %10 {offsets = [1, 0, 0], sizes = [1, 8, 8], strides = [1, 1, 1]} : vector<3x8x8xf32> to vector<1x8x8xf32>
    %58 = vector.shape_cast %57 : vector<1x8x8xf32> to vector<8x8xf32>
    %59 = vector.broadcast %56 : f32 to vector<8x8xf32>
    %60 = arith.mulf %59, %58 : vector<8x8xf32>
    %61 = arith.addf %55, %60 : vector<8x8xf32>
    %c2_30 = arith.constant 2 : index
    %c2_31 = arith.constant 2 : index
    %62 = memref.load %arg5[%c2_30, %c2_31] : memref<8x3xf32, #tpu.memory_space<smem>>
    %63 = vector.extract_strided_slice %10 {offsets = [2, 0, 0], sizes = [1, 8, 8], strides = [1, 1, 1]} : vector<3x8x8xf32> to vector<1x8x8xf32>
    %64 = vector.shape_cast %63 : vector<1x8x8xf32> to vector<8x8xf32>
    %65 = vector.broadcast %62 : f32 to vector<8x8xf32>
    %66 = arith.mulf %65, %64 : vector<8x8xf32>
    %67 = arith.addf %61, %66 : vector<8x8xf32>
    %c0_32 = arith.constant 0 : index
    %c2_33 = arith.constant 2 : index
    %c0_34 = arith.constant 0 : index
    %c0_35 = arith.constant 0 : index
    %68 = vector.load %arg6[%c0_32, %c2_33, %c0_34, %c0_35] : memref<1x8x8x8xf32, #tpu.memory_space<vmem>>, vector<1x1x8x8xf32>
    %69 = vector.shape_cast %68 : vector<1x1x8x8xf32> to vector<8x8xf32>
    %70 = vector.shape_cast %67 : vector<8x8xf32> to vector<1x1x8x8xf32>
    tpu.vector_store %arg6[%c0_32, %c2_33, %c0_34, %c0_35], %70 {strides = array<i32>} : memref<1x8x8x8xf32, #tpu.memory_space<vmem>>, vector<1x1x8x8xf32>,
    %c3 = arith.constant 3 : index
    %c0_36 = arith.constant 0 : index
    %71 = memref.load %arg5[%c3, %c0_36] : memref<8x3xf32, #tpu.memory_space<smem>>
    %72 = vector.extract_strided_slice %10 {offsets = [0, 0, 0], sizes = [1, 8, 8], strides = [1, 1, 1]} : vector<3x8x8xf32> to vector<1x8x8xf32>
    %73 = vector.shape_cast %72 : vector<1x8x8xf32> to vector<8x8xf32>
    %74 = vector.broadcast %71 : f32 to vector<8x8xf32>
    %75 = arith.mulf %74, %73 : vector<8x8xf32>
    %c3_37 = arith.constant 3 : index
    %c1_38 = arith.constant 1 : index
    %76 = memref.load %arg5[%c3_37, %c1_38] : memref<8x3xf32, #tpu.memory_space<smem>>
    %77 = vector.extract_strided_slice %10 {offsets = [1, 0, 0], sizes = [1, 8, 8], strides = [1, 1, 1]} : vector<3x8x8xf32> to vector<1x8x8xf32>
    %78 = vector.shape_cast %77 : vector<1x8x8xf32> to vector<8x8xf32>
    %79 = vector.broadcast %76 : f32 to vector<8x8xf32>
    %80 = arith.mulf %79, %78 : vector<8x8xf32>
    %81 = arith.addf %75, %80 : vector<8x8xf32>
    %c3_39 = arith.constant 3 : index
    %c2_40 = arith.constant 2 : index
    %82 = memref.load %arg5[%c3_39, %c2_40] : memref<8x3xf32, #tpu.memory_space<smem>>
    %83 = vector.extract_strided_slice %10 {offsets = [2, 0, 0], sizes = [1, 8, 8], strides = [1, 1, 1]} : vector<3x8x8xf32> to vector<1x8x8xf32>
    %84 = vector.shape_cast %83 : vector<1x8x8xf32> to vector<8x8xf32>
    %85 = vector.broadcast %82 : f32 to vector<8x8xf32>
    %86 = arith.mulf %85, %84 : vector<8x8xf32>
    %87 = arith.addf %81, %86 : vector<8x8xf32>
    %c0_41 = arith.constant 0 : index
    %c3_42 = arith.constant 3 : index
    %c0_43 = arith.constant 0 : index
    %c0_44 = arith.constant 0 : index
    %88 = vector.load %arg6[%c0_41, %c3_42, %c0_43, %c0_44] : memref<1x8x8x8xf32, #tpu.memory_space<vmem>>, vector<1x1x8x8xf32>
    %89 = vector.shape_cast %88 : vector<1x1x8x8xf32> to vector<8x8xf32>
    %90 = vector.shape_cast %87 : vector<8x8xf32> to vector<1x1x8x8xf32>
    tpu.vector_store %arg6[%c0_41, %c3_42, %c0_43, %c0_44], %90 {strides = array<i32>} : memref<1x8x8x8xf32, #tpu.memory_space<vmem>>, vector<1x1x8x8xf32>,
    %c4 = arith.constant 4 : index
    %c0_45 = arith.constant 0 : index
    %91 = memref.load %arg5[%c4, %c0_45] : memref<8x3xf32, #tpu.memory_space<smem>>
    %92 = vector.extract_strided_slice %10 {offsets = [0, 0, 0], sizes = [1, 8, 8], strides = [1, 1, 1]} : vector<3x8x8xf32> to vector<1x8x8xf32>
    %93 = vector.shape_cast %92 : vector<1x8x8xf32> to vector<8x8xf32>
    %94 = vector.broadcast %91 : f32 to vector<8x8xf32>
    %95 = arith.mulf %94, %93 : vector<8x8xf32>
    %c4_46 = arith.constant 4 : index
    %c1_47 = arith.constant 1 : index
    %96 = memref.load %arg5[%c4_46, %c1_47] : memref<8x3xf32, #tpu.memory_space<smem>>
    %97 = vector.extract_strided_slice %10 {offsets = [1, 0, 0], sizes = [1, 8, 8], strides = [1, 1, 1]} : vector<3x8x8xf32> to vector<1x8x8xf32>
    %98 = vector.shape_cast %97 : vector<1x8x8xf32> to vector<8x8xf32>
    %99 = vector.broadcast %96 : f32 to vector<8x8xf32>
    %100 = arith.mulf %99, %98 : vector<8x8xf32>
    %101 = arith.addf %95, %100 : vector<8x8xf32>
    %c4_48 = arith.constant 4 : index
    %c2_49 = arith.constant 2 : index
    %102 = memref.load %arg5[%c4_48, %c2_49] : memref<8x3xf32, #tpu.memory_space<smem>>
    %103 = vector.extract_strided_slice %10 {offsets = [2, 0, 0], sizes = [1, 8, 8], strides = [1, 1, 1]} : vector<3x8x8xf32> to vector<1x8x8xf32>
    %104 = vector.shape_cast %103 : vector<1x8x8xf32> to vector<8x8xf32>
    %105 = vector.broadcast %102 : f32 to vector<8x8xf32>
    %106 = arith.mulf %105, %104 : vector<8x8xf32>
    %107 = arith.addf %101, %106 : vector<8x8xf32>
    %c0_50 = arith.constant 0 : index
    %c4_51 = arith.constant 4 : index
    %c0_52 = arith.constant 0 : index
    %c0_53 = arith.constant 0 : index
    %108 = vector.load %arg6[%c0_50, %c4_51, %c0_52, %c0_53] : memref<1x8x8x8xf32, #tpu.memory_space<vmem>>, vector<1x1x8x8xf32>
    %109 = vector.shape_cast %108 : vector<1x1x8x8xf32> to vector<8x8xf32>
    %110 = vector.shape_cast %107 : vector<8x8xf32> to vector<1x1x8x8xf32>
    tpu.vector_store %arg6[%c0_50, %c4_51, %c0_52, %c0_53], %110 {strides = array<i32>} : memref<1x8x8x8xf32, #tpu.memory_space<vmem>>, vector<1x1x8x8xf32>,
    %c5 = arith.constant 5 : index
    %c0_54 = arith.constant 0 : index
    %111 = memref.load %arg5[%c5, %c0_54] : memref<8x3xf32, #tpu.memory_space<smem>>
    %112 = vector.extract_strided_slice %10 {offsets = [0, 0, 0], sizes = [1, 8, 8], strides = [1, 1, 1]} : vector<3x8x8xf32> to vector<1x8x8xf32>
    %113 = vector.shape_cast %112 : vector<1x8x8xf32> to vector<8x8xf32>
    %114 = vector.broadcast %111 : f32 to vector<8x8xf32>
    %115 = arith.mulf %114, %113 : vector<8x8xf32>
    %c5_55 = arith.constant 5 : index
    %c1_56 = arith.constant 1 : index
    %116 = memref.load %arg5[%c5_55, %c1_56] : memref<8x3xf32, #tpu.memory_space<smem>>
    %117 = vector.extract_strided_slice %10 {offsets = [1, 0, 0], sizes = [1, 8, 8], strides = [1, 1, 1]} : vector<3x8x8xf32> to vector<1x8x8xf32>
    %118 = vector.shape_cast %117 : vector<1x8x8xf32> to vector<8x8xf32>
    %119 = vector.broadcast %116 : f32 to vector<8x8xf32>
    %120 = arith.mulf %119, %118 : vector<8x8xf32>
    %121 = arith.addf %115, %120 : vector<8x8xf32>
    %c5_57 = arith.constant 5 : index
    %c2_58 = arith.constant 2 : index
    %122 = memref.load %arg5[%c5_57, %c2_58] : memref<8x3xf32, #tpu.memory_space<smem>>
    %123 = vector.extract_strided_slice %10 {offsets = [2, 0, 0], sizes = [1, 8, 8], strides = [1, 1, 1]} : vector<3x8x8xf32> to vector<1x8x8xf32>
    %124 = vector.shape_cast %123 : vector<1x8x8xf32> to vector<8x8xf32>
    %125 = vector.broadcast %122 : f32 to vector<8x8xf32>
    %126 = arith.mulf %125, %124 : vector<8x8xf32>
    %127 = arith.addf %121, %126 : vector<8x8xf32>
    %c0_59 = arith.constant 0 : index
    %c5_60 = arith.constant 5 : index
    %c0_61 = arith.constant 0 : index
    %c0_62 = arith.constant 0 : index
    %128 = vector.load %arg6[%c0_59, %c5_60, %c0_61, %c0_62] : memref<1x8x8x8xf32, #tpu.memory_space<vmem>>, vector<1x1x8x8xf32>
    %129 = vector.shape_cast %128 : vector<1x1x8x8xf32> to vector<8x8xf32>
    %130 = vector.shape_cast %127 : vector<8x8xf32> to vector<1x1x8x8xf32>
    tpu.vector_store %arg6[%c0_59, %c5_60, %c0_61, %c0_62], %130 {strides = array<i32>} : memref<1x8x8x8xf32, #tpu.memory_space<vmem>>, vector<1x1x8x8xf32>,
    %c6 = arith.constant 6 : index
    %c0_63 = arith.constant 0 : index
    %131 = memref.load %arg5[%c6, %c0_63] : memref<8x3xf32, #tpu.memory_space<smem>>
    %132 = vector.extract_strided_slice %10 {offsets = [0, 0, 0], sizes = [1, 8, 8], strides = [1, 1, 1]} : vector<3x8x8xf32> to vector<1x8x8xf32>
    %133 = vector.shape_cast %132 : vector<1x8x8xf32> to vector<8x8xf32>
    %134 = vector.broadcast %131 : f32 to vector<8x8xf32>
    %135 = arith.mulf %134, %133 : vector<8x8xf32>
    %c6_64 = arith.constant 6 : index
    %c1_65 = arith.constant 1 : index
    %136 = memref.load %arg5[%c6_64, %c1_65] : memref<8x3xf32, #tpu.memory_space<smem>>
    %137 = vector.extract_strided_slice %10 {offsets = [1, 0, 0], sizes = [1, 8, 8], strides = [1, 1, 1]} : vector<3x8x8xf32> to vector<1x8x8xf32>
    %138 = vector.shape_cast %137 : vector<1x8x8xf32> to vector<8x8xf32>
    %139 = vector.broadcast %136 : f32 to vector<8x8xf32>
    %140 = arith.mulf %139, %138 : vector<8x8xf32>
    %141 = arith.addf %135, %140 : vector<8x8xf32>
    %c6_66 = arith.constant 6 : index
    %c2_67 = arith.constant 2 : index
    %142 = memref.load %arg5[%c6_66, %c2_67] : memref<8x3xf32, #tpu.memory_space<smem>>
    %143 = vector.extract_strided_slice %10 {offsets = [2, 0, 0], sizes = [1, 8, 8], strides = [1, 1, 1]} : vector<3x8x8xf32> to vector<1x8x8xf32>
    %144 = vector.shape_cast %143 : vector<1x8x8xf32> to vector<8x8xf32>
    %145 = vector.broadcast %142 : f32 to vector<8x8xf32>
    %146 = arith.mulf %145, %144 : vector<8x8xf32>
    %147 = arith.addf %141, %146 : vector<8x8xf32>
    %c0_68 = arith.constant 0 : index
    %c6_69 = arith.constant 6 : index
    %c0_70 = arith.constant 0 : index
    %c0_71 = arith.constant 0 : index
    %148 = vector.load %arg6[%c0_68, %c6_69, %c0_70, %c0_71] : memref<1x8x8x8xf32, #tpu.memory_space<vmem>>, vector<1x1x8x8xf32>
    %149 = vector.shape_cast %148 : vector<1x1x8x8xf32> to vector<8x8xf32>
    %150 = vector.shape_cast %147 : vector<8x8xf32> to vector<1x1x8x8xf32>
    tpu.vector_store %arg6[%c0_68, %c6_69, %c0_70, %c0_71], %150 {strides = array<i32>} : memref<1x8x8x8xf32, #tpu.memory_space<vmem>>, vector<1x1x8x8xf32>,
    %c7 = arith.constant 7 : index
    %c0_72 = arith.constant 0 : index
    %151 = memref.load %arg5[%c7, %c0_72] : memref<8x3xf32, #tpu.memory_space<smem>>
    %152 = vector.extract_strided_slice %10 {offsets = [0, 0, 0], sizes = [1, 8, 8], strides = [1, 1, 1]} : vector<3x8x8xf32> to vector<1x8x8xf32>
    %153 = vector.shape_cast %152 : vector<1x8x8xf32> to vector<8x8xf32>
    %154 = vector.broadcast %151 : f32 to vector<8x8xf32>
    %155 = arith.mulf %154, %153 : vector<8x8xf32>
    %c7_73 = arith.constant 7 : index
    %c1_74 = arith.constant 1 : index
    %156 = memref.load %arg5[%c7_73, %c1_74] : memref<8x3xf32, #tpu.memory_space<smem>>
    %157 = vector.extract_strided_slice %10 {offsets = [1, 0, 0], sizes = [1, 8, 8], strides = [1, 1, 1]} : vector<3x8x8xf32> to vector<1x8x8xf32>
    %158 = vector.shape_cast %157 : vector<1x8x8xf32> to vector<8x8xf32>
    %159 = vector.broadcast %156 : f32 to vector<8x8xf32>
    %160 = arith.mulf %159, %158 : vector<8x8xf32>
    %161 = arith.addf %155, %160 : vector<8x8xf32>
    %c7_75 = arith.constant 7 : index
    %c2_76 = arith.constant 2 : index
    %162 = memref.load %arg5[%c7_75, %c2_76] : memref<8x3xf32, #tpu.memory_space<smem>>
    %163 = vector.extract_strided_slice %10 {offsets = [2, 0, 0], sizes = [1, 8, 8], strides = [1, 1, 1]} : vector<3x8x8xf32> to vector<1x8x8xf32>
    %164 = vector.shape_cast %163 : vector<1x8x8xf32> to vector<8x8xf32>
    %165 = vector.broadcast %162 : f32 to vector<8x8xf32>
    %166 = arith.mulf %165, %164 : vector<8x8xf32>
    %167 = arith.addf %161, %166 : vector<8x8xf32>
    %c0_77 = arith.constant 0 : index
    %c7_78 = arith.constant 7 : index
    %c0_79 = arith.constant 0 : index
    %c0_80 = arith.constant 0 : index
    %168 = vector.load %arg6[%c0_77, %c7_78, %c0_79, %c0_80] : memref<1x8x8x8xf32, #tpu.memory_space<vmem>>, vector<1x1x8x8xf32>
    %169 = vector.shape_cast %168 : vector<1x1x8x8xf32> to vector<8x8xf32>
    %170 = vector.shape_cast %167 : vector<8x8xf32> to vector<1x1x8x8xf32>
    tpu.vector_store %arg6[%c0_77, %c7_78, %c0_79, %c0_80], %170 {strides = array<i32>} : memref<1x8x8x8xf32, #tpu.memory_space<vmem>>, vector<1x1x8x8xf32>,
    return
  }
  func.func @transform_0(%arg0: i32, %arg1: i32) -> (i32, i32, i32, i32) {
    %c0_i32 = arith.constant 0 : i32
    %c0_i32_0 = arith.constant 0 : i32
    %c0_i32_1 = arith.constant 0 : i32
    return %arg0, %c0_i32, %arg1, %c0_i32_0 : i32, i32, i32, i32
  }
  func.func @transform_1(%arg0: i32, %arg1: i32) -> (i32, i32) {
    %c0_i32 = arith.constant 0 : i32
    %c0_i32_0 = arith.constant 0 : i32
    %c0_i32_1 = arith.constant 0 : i32
    return %c0_i32, %c0_i32_0 : i32, i32
  }
  func.func @transform_2(%arg0: i32, %arg1: i32) -> (i32, i32) {
    %c0_i32 = arith.constant 0 : i32
    %c0_i32_0 = arith.constant 0 : i32
    %c0_i32_1 = arith.constant 0 : i32
    return %c0_i32, %c0_i32_0 : i32, i32
  }
  func.func @transform_3(%arg0: i32, %arg1: i32) -> (i32, i32) {
    %c0_i32 = arith.constant 0 : i32
    %c0_i32_0 = arith.constant 0 : i32
    %c0_i32_1 = arith.constant 0 : i32
    return %c0_i32, %c0_i32_0 : i32, i32
  }
  func.func @transform_4(%arg0: i32, %arg1: i32) -> (i32, i32, i32, i32) {
    %c0_i32 = arith.constant 0 : i32
    %c0_i32_0 = arith.constant 0 : i32
    %c0_i32_1 = arith.constant 0 : i32
    return %arg0, %c0_i32, %arg1, %c0_i32_0 : i32, i32, i32, i32
  }
}

</mosaic_0001>

<llo_original>
// kernel: _spatial_rescale.1
$region0: #{_spatial_rescale.1}
  #allocation0 [shape = 'u32[]', space=smem, size = 0x4, offset = 0x4, fixed_abs, tag = 'smem constant byte address 0x4 - core index']
  #allocation1 [shape = 'u32[144,128]{1,0:T(1,128)}', space=vmem, size = 0x12000, scoped, tag = 'internal scratch']
  %s0 = inlined_call_operand.hbm [shape: f32[2,3,16,16], index: 0, kind: input, shape index: {}]
  %s1 = inlined_call_operand.vmem [shape: f32[8,16], index: 1, kind: input, shape index: {}]
  %s2 = inlined_call_operand.vmem [shape: f32[16,8], index: 2, kind: input, shape index: {}]
  %s3 = inlined_call_operand.vmem [shape: f32[8,3], index: 3, kind: input, shape index: {}]
  %s4 = inlined_call_operand.hbm [shape: f32[2,8,8,8], index: 4, kind: output, shape index: {}]
  %s5 = sld [smem:[#allocation0]]
  $region57: #{_spatial_rescale.1} parent=0
    _
  %s7 = ssub.s32 1, %s5
  %s8 = scalar_select 0, %s7, %s5
  $region1: #{_spatial_rescale.1} parent=0
    #allocation2 [shape = 'u8[49152]{0}', space=vmem, size = 0xc000, scoped, tag = 'input window, operand 0']
    #allocation3 [shape = 's32[2]{0}', space=sflag, size = 0x8, scoped, tag = 'scoped memory for _spatial_rescale.1']
    #allocation4 [shape = 's32[2]{0}', space=sflag, size = 0x8, scoped, tag = 'scoped memory for _spatial_rescale.1']
    #allocation5 [shape = 's32[2]{0}', space=sflag, size = 0x8, scoped, tag = 'scoped memory for _spatial_rescale.1']
    #allocation6 [shape = 'u8[4096]{0}', space=smem, size = 0x1000, scoped, tag = 'input window, operand 3, single buffered']
    #allocation7 [shape = 'u8[65536]{0}', space=vmem, size = 0x10000, scoped, tag = 'output window, operand 0']
    %9 = vsyncpa [#allocation3], 0
    %s10 = scalar_lea.sflag [#allocation3], 1
    %11 = vsyncpa %s10, 0
    %12 = vsyncpa [#allocation5], 0
    %13 = vsyncpa [#allocation4], 0
    %s14 = scalar_lea.sflag [#allocation4], 1
    %15 = vsyncpa %s14, 0
    loop: start=0, step=1, limit=4
    $region2: #{_spatial_rescale.1} parent=1 // loop_pre_header
      _
    $region3: #{_spatial_rescale.1} parent=1 // loop_header
      %s17 = sphi 0, %s21
      %p18 = scmp.ge.s32.totalorder %s17, 4
      %s24 = sphi 0, %s36
      %s25 = sphi 0, %s32
      %s26 = sphi 0, %s24
      %s27 = sphi 0, %s25
      %s28 = sphi 0, %s26
      %s29 = sphi 0, %s27
      %s41 = sphi 0, %s43
      %s44 = sphi 0, %s41
      %s45 = sphi 0, %s44
      %s61 = sphi 0, %s45
      %s65 = sphi 0, %s65
      %s67 = sphi 0, %s65
      %s68 = sphi 0, %s67
      %s82 = sphi 0, %s68
      %s86 = sphi 0, %s86
      %s88 = sphi 0, %s86
      %s89 = sphi 0, %s88
      %s103 = sphi 0, %s89
      %s107 = sphi 0, %s107
      %s109 = sphi 0, %s107
      %s110 = sphi 0, %s109
      %s124 = sphi 0, %s110
      %s132 = sphi 0, %s134
      %s135 = sphi 0, %s132
      %s136 = sphi 0, %s135
      %s152 = sphi 0, %s136
    $region4: #{_spatial_rescale.1} parent=1 // loop_header_branch
      %20 = sbr.rel (%p18) target = $region8
    $region5: #{_spatial_rescale.1} parent=1 // loop_body
      %s22 = ssub.s32 %s17, 1
      %s23 = ssub.s32 %s17, 2
      %s30 = sadd.s32 1, %s25
      %p31 = scmp.ge.s32.totalorder %s30, 1
      %s32 = scalar_select %p31, 0, %s30
      %s33 = sadd.s32 1, %s24
      %s34 = scalar_select %p31, %s33, %s24
      %p35 = scmp.ge.s32.totalorder %s34, 2
      %s36 = scalar_select %p35, 0, %s34
      %s37 = ssub.s32 %s24, %s36
      %s38 = ssub.s32 %s25, %s32
      %s39 = sor.u32 %s37, %s38
      %p40 = scmp.eq.s32.totalorder %s39, 0
      %s42 = sadd.s32 %s41, 1
      %s43 = scalar_select %p40, %s41, %s42
      %p46 = pneg %p40
      %p47 = scmp.eq.s32.totalorder %s17, 1
      %p48 = por %p46, %p47
      %p49 = scmp.ne.s32.totalorder %s41, %s44
      %p50 = scmp.eq.s32.totalorder %s17, 0
      %p51 = por %p49, %p50
      %p52 = scmp.ne.s32.totalorder %s41, %s44
      %p53 = scmp.eq.s32.totalorder %s22, 1
      %p54 = por %p52, %p53
      %p55 = scmp.ne.s32.totalorder %s44, %s45
      %p56 = scmp.eq.s32.totalorder %s22, 0
      %p57 = por %p55, %p56
      %p58 = scmp.ne.s32.totalorder %s44, %s45
      %p59 = scmp.eq.s32.totalorder %s23, 1
      %p60 = por %p58, %p59
      %p62 = scmp.ne.s32.totalorder %s45, %s61
      %p63 = scmp.eq.s32.totalorder %s23, 0
      %p64 = por %p62, %p63
      %s66 = sadd.s32 %s65, 1
      %p69 = scmp.eq.s32.totalorder %s17, 1
      %p70 = scmp.ne.s32.totalorder %s65, %s67
      %p71 = scmp.eq.s32.totalorder %s17, 0
      %p72 = por %p70, %p71
      %p73 = scmp.ne.s32.totalorder %s65, %s67
      %p74 = scmp.eq.s32.totalorder %s22, 1
      %p75 = por %p73, %p74
      %p76 = scmp.ne.s32.totalorder %s67, %s68
      %p77 = scmp.eq.s32.totalorder %s22, 0
      %p78 = por %p76, %p77
      %p79 = scmp.ne.s32.totalorder %s67, %s68
      %p80 = scmp.eq.s32.totalorder %s23, 1
      %p81 = por %p79, %p80
      %p83 = scmp.ne.s32.totalorder %s68, %s82
      %p84 = scmp.eq.s32.totalorder %s23, 0
      %p85 = por %p83, %p84
      %s87 = sadd.s32 %s86, 1
      %p90 = scmp.eq.s32.totalorder %s17, 1
      %p91 = scmp.ne.s32.totalorder %s86, %s88
      %p92 = scmp.eq.s32.totalorder %s17, 0
      %p93 = por %p91, %p92
      %p94 = scmp.ne.s32.totalorder %s86, %s88
      %p95 = scmp.eq.s32.totalorder %s22, 1
      %p96 = por %p94, %p95
      %p97 = scmp.ne.s32.totalorder %s88, %s89
      %p98 = scmp.eq.s32.totalorder %s22, 0
      %p99 = por %p97, %p98
      %p100 = scmp.ne.s32.totalorder %s88, %s89
      %p101 = scmp.eq.s32.totalorder %s23, 1
      %p102 = por %p100, %p101
      %p104 = scmp.ne.s32.totalorder %s89, %s103
      %p105 = scmp.eq.s32.totalorder %s23, 0
      %p106 = por %p104, %p105
      %s108 = sadd.s32 %s107, 1
      %p111 = scmp.eq.s32.totalorder %s17, 1
      %p112 = scmp.ne.s32.totalorder %s107, %s109
      %p113 = scmp.eq.s32.totalorder %s17, 0
      %p114 = por %p112, %p113
      %p115 = scmp.ne.s32.totalorder %s107, %s109
      %p116 = scmp.eq.s32.totalorder %s22, 1
      %p117 = por %p115, %p116
      %p118 = scmp.ne.s32.totalorder %s109, %s110
      %p119 = scmp.eq.s32.totalorder %s22, 0
      %p120 = por %p118, %p119
      %p121 = scmp.ne.s32.totalorder %s109, %s110
      %p122 = scmp.eq.s32.totalorder %s23, 1
      %p123 = por %p121, %p122
      %p125 = scmp.ne.s32.totalorder %s110, %s124
      %p126 = scmp.eq.s32.totalorder %s23, 0
      %p127 = por %p125, %p126
      %s128 = ssub.s32 %s24, %s36
      %s129 = ssub.s32 %s25, %s32
      %s130 = sor.u32 %s128, %s129
      %p131 = scmp.eq.s32.totalorder %s130, 0
      %s133 = sadd.s32 %s132, 1
      %s134 = scalar_select %p131, %s132, %s133
      %p137 = pneg %p131
      %p138 = scmp.eq.s32.totalorder %s17, 1
      %p139 = por %p137, %p138
      %p140 = scmp.ne.s32.totalorder %s132, %s135
      %p141 = scmp.eq.s32.totalorder %s17, 0
      %p142 = por %p140, %p141
      %p143 = scmp.ne.s32.totalorder %s132, %s135
      %p144 = scmp.eq.s32.totalorder %s22, 1
      %p145 = por %p143, %p144
      %p146 = scmp.ne.s32.totalorder %s135, %s136
      %p147 = scmp.eq.s32.totalorder %s22, 0
      %p148 = por %p146, %p147
      %p149 = scmp.ne.s32.totalorder %s135, %s136
      %p150 = scmp.eq.s32.totalorder %s23, 1
      %p151 = por %p149, %p150
      %p153 = scmp.ne.s32.totalorder %s136, %s152
      %p154 = scmp.eq.s32.totalorder %s23, 0
      %p155 = por %p153, %p154
      %p156 = scmp.le.s32.totalorder 1, %s17
      %p157 = scmp.lt.s32.totalorder %s17, 3
      %p158 = pnand %p156, %p157
      %p159 = pneg %p158
      // Predicated region
      $region9: #{_spatial_rescale.1} parent=5 // pred_check
        _
      $region10: #{_spatial_rescale.1} parent=5 // pred_check_branch
        %161 = sbr.rel (%p158) target = $region12
      $region11: #{_spatial_rescale.1} parent=5 // pred_region
        %s162 = ssub.s32 %s17, 1
        // Predicated region
        $region13: #{_spatial_rescale.1} parent=11 // pred_check
          %p163 = pneg %p78
        $region14: #{_spatial_rescale.1} parent=11 // pred_check_branch
          %165 = sbr.rel (%p163) target = $region16
        $region15: #{_spatial_rescale.1} parent=11 // pred_region
          _
        $region16: #{_spatial_rescale.1} parent=11 // pred_fallthru
          _
        // Predicated region
        $region17: #{_spatial_rescale.1} parent=11 // pred_check
          %p166 = pneg %p99
        $region18: #{_spatial_rescale.1} parent=11 // pred_check_branch
          %168 = sbr.rel (%p166) target = $region20
        $region19: #{_spatial_rescale.1} parent=11 // pred_region
          _
        $region20: #{_spatial_rescale.1} parent=11 // pred_fallthru
          _
        // Predicated region
        $region21: #{_spatial_rescale.1} parent=11 // pred_check
          %p169 = pneg %p120
        $region22: #{_spatial_rescale.1} parent=11 // pred_check_branch
          %171 = sbr.rel (%p169) target = $region24
        $region23: #{_spatial_rescale.1} parent=11 // pred_region
          %s173 = ssub.s32 128, 128
          %174 = vsyncadd [#allocation5], %s173
          %s176 = sshll.u32 %s3, 4
          %s177 = int_to_ptr.vmem [resolvable:$true] %s176
          %179 = dma.vmem_to_smem %s177, 128, [#allocation6], [#allocation5]
        $region24: #{_spatial_rescale.1} parent=11 // pred_fallthru
          _
      $region12: #{_spatial_rescale.1} parent=5 // pred_fallthru
        _
      %p180 = scmp.lt.s32.totalorder %s17, 2
      // Predicated region
      $region25: #{_spatial_rescale.1} parent=5 // pred_check
        %p181 = pneg %p180
      $region26: #{_spatial_rescale.1} parent=5 // pred_check_branch
        %183 = sbr.rel (%p181) target = $region28
      $region27: #{_spatial_rescale.1} parent=5 // pred_region
        // Predicated region
        $region29: #{_spatial_rescale.1} parent=27 // pred_check
          %p184 = pneg %p51
        $region30: #{_spatial_rescale.1} parent=27 // pred_check_branch
          %186 = sbr.rel (%p184) target = $region32
        $region31: #{_spatial_rescale.1} parent=27 // pred_region
          %s187 = sand.u32 %s41, 1
          %s188 = scalar_lea.sflag [#allocation3], %s187
          %s189 = sand.u32 %s41, 1
          %s190 = smul.addr %s189, 48
          %s191 = scalar_lea.vmem [#allocation2], %s190
          %s192 = smul.u32 2, %s25
          %s194 = ssub.s32 768, 768
          %195 = vsyncadd %s188, %s194
          %s196 = smul.addr %s24, 6
          %s197 = sadd.s32 %s192, %s196
          %s198 = smul.addr %s197, 128
          %s199 = scalar_lea.hbm %s0, %s198
          %s200 = sshll.u32 %s191, 4
          %s201 = int_to_ptr.vmem [resolvable:$true] %s200
          %206 = dma.hbm_to_vmem [thread:$0]  %s199, 768, %s201, %s188, 128, 128, 8
        $region32: #{_spatial_rescale.1} parent=27 // pred_fallthru
          _
      $region28: #{_spatial_rescale.1} parent=5 // pred_fallthru
        _
      %p207 = scmp.le.s32.totalorder 1, %s17
      %p208 = scmp.lt.s32.totalorder %s17, 3
      %p209 = pnand %p207, %p208
      %p210 = pneg %p209
      // Predicated region
      $region33: #{_spatial_rescale.1} parent=5 // pred_check
        _
      $region34: #{_spatial_rescale.1} parent=5 // pred_check_branch
        %212 = sbr.rel (%p209) target = $region36
      $region35: #{_spatial_rescale.1} parent=5 // pred_region
        %s213 = ssub.s32 %s17, 1
        %s214 = sand.u32 %s44, 1
        %s215 = scalar_lea.sflag [#allocation3], %s214
        %s216 = sand.u32 %s44, 1
        %s217 = smul.addr %s216, 48
        %s218 = scalar_lea.vmem [#allocation2], %s217
        // Predicated region
        $region37: #{_spatial_rescale.1} parent=35 // pred_check
          %p219 = pneg %p57
        $region38: #{_spatial_rescale.1} parent=35 // pred_check_branch
          %221 = sbr.rel (%p219) target = $region40
        $region39: #{_spatial_rescale.1} parent=35 // pred_region
          %222 = dma.done %s215, 768
        $region40: #{_spatial_rescale.1} parent=35 // pred_fallthru
          _
        // Predicated region
        $region41: #{_spatial_rescale.1} parent=35 // pred_check
          %p223 = pneg %p120
        $region42: #{_spatial_rescale.1} parent=35 // pred_check_branch
          %225 = sbr.rel (%p223) target = $region44
        $region43: #{_spatial_rescale.1} parent=35 // pred_region
          %226 = dma.done [#allocation5], 128
        $region44: #{_spatial_rescale.1} parent=35 // pred_fallthru
          _
        %227 = sfence
        %s228 = sand.u32 %s44, 1
        %s229 = scalar_lea.sflag [#allocation3], %s228
        %s230 = sand.u32 %s44, 1
        %s231 = smul.addr %s230, 48
        %s232 = scalar_lea.vmem [#allocation2], %s231
        %p233 = pneg %p57
        %p234 = pneg %p54
        %p235 = pneg %p78
        %p236 = pneg %p75
        %p237 = pneg %p99
        %p238 = pneg %p96
        %p239 = pneg %p120
        %p240 = pneg %p117
        %p241 = pneg %p148
        %p242 = pneg %p145
        %s243 = sand.u32 %s135, 1
        %s244 = scalar_lea.sflag [#allocation4], %s243
        %s245 = sand.u32 %s135, 1
        %s246 = smul.addr %s245, 64
        %s247 = scalar_lea.vmem [#allocation7], %s246
        %s248 = smul.u32 2, %s27
        %v249 = vld [vmem:[%s1] sm:$0xff]
        %v250 = vld [vmem:[%s2] sm:$0xff]
        %v251 = vld [vmem:[%s2 + $0x8] sm:$0xff]
        %v252 = vld [vmem:[%s218] sm:$0xff]
        %v253 = vld [vmem:[%s218 + $0x8] sm:$0xff]
        %v254 = vld [vmem:[%s218 + $0x10] sm:$0xff]
        %v255 = vld [vmem:[%s218 + $0x18] sm:$0xff]
        %v256 = vld [vmem:[%s218 + $0x20] sm:$0xff]
        %v257 = vld [vmem:[%s218 + $0x28] sm:$0xff]
        %vm258 = vcmask 130048
        %v260 = vsel %vm258, %v249, 0
        %262 = vmatprep.subr.mxu0 0.0
        %263 = vmatpush1.msra.mxu0 0.0
        %264 = vmatprep.subr.mxu0 0.0
        %265 = vmatpush1.msra.mxu0 0.0
        %266 = vmatprep.subr.mxu0 0.0
        %267 = vmatpush1.msra.mxu0 0.0
        %268 = vmatprep.subr.mxu0 0.0
        %269 = vmatpush1.msra.mxu0 0.0
        %270 = vmatprep.subr.mxu0 0.0
        %271 = vmatpush1.msra.mxu0 0.0
        %272 = vmatprep.subr.mxu0 0.0
        %273 = vmatpush1.msra.mxu0 0.0
        %274 = vmatprep.subr.mxu0 0.0
        %275 = vmatpush1.msra.mxu0 0.0
        %276 = vmatprep.subr.mxu0 0.0
        %277 = vmatpush1.msra.mxu0 0.0
        %278 = vmatprep.subr.mxu0 0.0
        %279 = vmatpush1.msra.mxu0 0.0
        %280 = vmatprep.subr.mxu0 0.0
        %281 = vmatpush1.msra.mxu0 0.0
        %282 = vmatprep.subr.mxu0 0.0
        %283 = vmatpush1.msra.mxu0 0.0
        %284 = vmatprep.subr.mxu0 0.0
        %285 = vmatpush1.msra.mxu0 0.0
        %286 = vmatprep.subr.mxu0 0.0
        %287 = vmatpush1.msra.mxu0 0.0
        %288 = vmatprep.subr.mxu0 0.0
        %289 = vmatpush1.msra.mxu0 0.0
        %290 = vmatprep.subr.mxu0 0.0
        %291 = vmatpush1.msra.mxu0 %v253
        %292 = vmatprep.subr.mxu0 0.0
        %293 = vmatpush1.msra.mxu0 %v252
        %294 = vmatprep.subr.mxu0 0.0
        %295 = vmatpush2.msra.mxu0 0.0
        %296 = vmatprep.subr.mxu0 0.0
        %297 = vmatpush2.msra.mxu0 0.0
        %298 = vmatprep.subr.mxu0 0.0
        %299 = vmatpush2.msra.mxu0 0.0
        %300 = vmatprep.subr.mxu0 0.0
        %301 = vmatpush2.msra.mxu0 0.0
        %302 = vmatprep.subr.mxu0 0.0
        %303 = vmatpush2.msra.mxu0 0.0
        %304 = vmatprep.subr.mxu0 0.0
        %305 = vmatpush2.msra.mxu0 0.0
        %306 = vmatprep.subr.mxu0 0.0
        %307 = vmatpush2.msra.mxu0 0.0
        %308 = vmatprep.subr.mxu0 0.0
        %309 = vmatpush2.msra.mxu0 0.0
        %310 = vmatprep.subr.mxu0 0.0
        %311 = vmatpush2.msra.mxu0 0.0
        %312 = vmatprep.subr.mxu0 0.0
        %313 = vmatpush2.msra.mxu0 0.0
        %314 = vmatprep.subr.mxu0 0.0
        %315 = vmatpush2.msra.mxu0 0.0
        %316 = vmatprep.subr.mxu0 0.0
        %317 = vmatpush2.msra.mxu0 0.0
        %318 = vmatprep.subr.mxu0 0.0
        %319 = vmatpush2.msra.mxu0 0.0
        %320 = vmatprep.subr.mxu0 0.0
        %321 = vmatpush2.msra.mxu0 0.0
        %322 = vmatprep.subr.mxu0 0.0
        %323 = vmatpush2.msra.mxu0 0.0
        %324 = vmatprep.subr.mxu0 0.0
        %325 = vmatpush2.msra.mxu0 0.0
        %326 = vmatprep.mubr.f32.mxu0 0.0
        %327 = vmatmul.mubr.f32.gmra.mxu0 %v260
        %v328 = vpop.f32.mrf.mxu0
        %v329 = vadd.f32 0.0, %v328
        %v330 = vpop.f32.mrf.mxu0
        %331 = vdwg.mxu0
        %332 = vmatprep.subr.mxu0 0.0
        %333 = vmatpush1.msra.mxu0 0.0
        %334 = vmatprep.subr.mxu0 0.0
        %335 = vmatpush1.msra.mxu0 0.0
        %336 = vmatprep.subr.mxu0 0.0
        %337 = vmatpush1.msra.mxu0 0.0
        %338 = vmatprep.subr.mxu0 0.0
        %339 = vmatpush1.msra.mxu0 0.0
        %340 = vmatprep.subr.mxu0 0.0
        %341 = vmatpush1.msra.mxu0 0.0
        %342 = vmatprep.subr.mxu0 0.0
        %343 = vmatpush1.msra.mxu0 0.0
        %344 = vmatprep.subr.mxu0 0.0
        %345 = vmatpush1.msra.mxu0 0.0
        %346 = vmatprep.subr.mxu0 0.0
        %347 = vmatpush1.msra.mxu0 0.0
        %348 = vmatprep.subr.mxu0 0.0
        %349 = vmatpush1.msra.mxu0 0.0
        %350 = vmatprep.subr.mxu0 0.0
        %351 = vmatpush1.msra.mxu0 0.0
        %352 = vmatprep.subr.mxu0 0.0
        %353 = vmatpush1.msra.mxu0 0.0
        %354 = vmatprep.subr.mxu0 0.0
        %355 = vmatpush1.msra.mxu0 0.0
        %356 = vmatprep.subr.mxu0 0.0
        %357 = vmatpush1.msra.mxu0 0.0
        %358 = vmatprep.subr.mxu0 0.0
        %359 = vmatpush1.msra.mxu0 0.0
        %360 = vmatprep.subr.mxu0 0.0
        %361 = vmatpush1.msra.mxu0 %v255
        %362 = vmatprep.subr.mxu0 0.0
        %363 = vmatpush1.msra.mxu0 %v254
        %364 = vmatprep.subr.mxu0 0.0
        %365 = vmatpush2.msra.mxu0 0.0
        %366 = vmatprep.subr.mxu0 0.0
        %367 = vmatpush2.msra.mxu0 0.0
        %368 = vmatprep.subr.mxu0 0.0
        %369 = vmatpush2.msra.mxu0 0.0
        %370 = vmatprep.subr.mxu0 0.0
        %371 = vmatpush2.msra.mxu0 0.0
        %372 = vmatprep.subr.mxu0 0.0
        %373 = vmatpush2.msra.mxu0 0.0
        %374 = vmatprep.subr.mxu0 0.0
        %375 = vmatpush2.msra.mxu0 0.0
        %376 = vmatprep.subr.mxu0 0.0
        %377 = vmatpush2.msra.mxu0 0.0
        %378 = vmatprep.subr.mxu0 0.0
        %379 = vmatpush2.msra.mxu0 0.0
        %380 = vmatprep.subr.mxu0 0.0
        %381 = vmatpush2.msra.mxu0 0.0
        %382 = vmatprep.subr.mxu0 0.0
        %383 = vmatpush2.msra.mxu0 0.0
        %384 = vmatprep.subr.mxu0 0.0
        %385 = vmatpush2.msra.mxu0 0.0
        %386 = vmatprep.subr.mxu0 0.0
        %387 = vmatpush2.msra.mxu0 0.0
        %388 = vmatprep.subr.mxu0 0.0
        %389 = vmatpush2.msra.mxu0 0.0
        %390 = vmatprep.subr.mxu0 0.0
        %391 = vmatpush2.msra.mxu0 0.0
        %392 = vmatprep.subr.mxu0 0.0
        %393 = vmatpush2.msra.mxu0 0.0
        %394 = vmatprep.subr.mxu0 0.0
        %395 = vmatpush2.msra.mxu0 0.0
        %396 = vmatprep.mubr.f32.mxu0 0.0
        %397 = vmatmul.mubr.f32.gmra.mxu0 %v260
        %v398 = vpop.f32.mrf.mxu0
        %v399 = vadd.f32 0.0, %v398
        %v400 = vpop.f32.mrf.mxu0
        %401 = vdwg.mxu0
        %402 = vmatprep.subr.mxu0 0.0
        %403 = vmatpush1.msra.mxu0 0.0
        %404 = vmatprep.subr.mxu0 0.0
        %405 = vmatpush1.msra.mxu0 0.0
        %406 = vmatprep.subr.mxu0 0.0
        %407 = vmatpush1.msra.mxu0 0.0
        %408 = vmatprep.subr.mxu0 0.0
        %409 = vmatpush1.msra.mxu0 0.0
        %410 = vmatprep.subr.mxu0 0.0
        %411 = vmatpush1.msra.mxu0 0.0
        %412 = vmatprep.subr.mxu0 0.0
        %413 = vmatpush1.msra.mxu0 0.0
        %414 = vmatprep.subr.mxu0 0.0
        %415 = vmatpush1.msra.mxu0 0.0
        %416 = vmatprep.subr.mxu0 0.0
        %417 = vmatpush1.msra.mxu0 0.0
        %418 = vmatprep.subr.mxu0 0.0
        %419 = vmatpush1.msra.mxu0 0.0
        %420 = vmatprep.subr.mxu0 0.0
        %421 = vmatpush1.msra.mxu0 0.0
        %422 = vmatprep.subr.mxu0 0.0
        %423 = vmatpush1.msra.mxu0 0.0
        %424 = vmatprep.subr.mxu0 0.0
        %425 = vmatpush1.msra.mxu0 0.0
        %426 = vmatprep.subr.mxu0 0.0
        %427 = vmatpush1.msra.mxu0 0.0
        %428 = vmatprep.subr.mxu0 0.0
        %429 = vmatpush1.msra.mxu0 0.0
        %430 = vmatprep.subr.mxu0 0.0
        %431 = vmatpush1.msra.mxu0 %v257
        %432 = vmatprep.subr.mxu0 0.0
        %433 = vmatpush1.msra.mxu0 %v256
        %434 = vmatprep.subr.mxu0 0.0
        %435 = vmatpush2.msra.mxu0 0.0
        %436 = vmatprep.subr.mxu0 0.0
        %437 = vmatpush2.msra.mxu0 0.0
        %438 = vmatprep.subr.mxu0 0.0
        %439 = vmatpush2.msra.mxu0 0.0
        %440 = vmatprep.subr.mxu0 0.0
        %441 = vmatpush2.msra.mxu0 0.0
        %442 = vmatprep.subr.mxu0 0.0
        %443 = vmatpush2.msra.mxu0 0.0
        %444 = vmatprep.subr.mxu0 0.0
        %445 = vmatpush2.msra.mxu0 0.0
        %446 = vmatprep.subr.mxu0 0.0
        %447 = vmatpush2.msra.mxu0 0.0
        %448 = vmatprep.subr.mxu0 0.0
        %449 = vmatpush2.msra.mxu0 0.0
        %450 = vmatprep.subr.mxu0 0.0
        %451 = vmatpush2.msra.mxu0 0.0
        %452 = vmatprep.subr.mxu0 0.0
        %453 = vmatpush2.msra.mxu0 0.0
        %454 = vmatprep.subr.mxu0 0.0
        %455 = vmatpush2.msra.mxu0 0.0
        %456 = vmatprep.subr.mxu0 0.0
        %457 = vmatpush2.msra.mxu0 0.0
        %458 = vmatprep.subr.mxu0 0.0
        %459 = vmatpush2.msra.mxu0 0.0
        %460 = vmatprep.subr.mxu0 0.0
        %461 = vmatpush2.msra.mxu0 0.0
        %462 = vmatprep.subr.mxu0 0.0
        %463 = vmatpush2.msra.mxu0 0.0
        %464 = vmatprep.subr.mxu0 0.0
        %465 = vmatpush2.msra.mxu0 0.0
        %466 = vmatprep.mubr.f32.mxu0 0.0
        %467 = vmatmul.mubr.f32.gmra.mxu0 %v260
        %v468 = vpop.f32.mrf.mxu0
        %v469 = vadd.f32 0.0, %v468
        %v470 = vpop.f32.mrf.mxu0
        %471 = vdwg.mxu0
        %v473 = vsel %vm258, %v329, 0
        %v476 = vsel %vm258, %v399, 0
        %v479 = vsel %vm258, %v469, 0
        %481 = vmatprep.subr.mxu0 0.0
        %482 = vmatpush1.msra.mxu0 0.0
        %483 = vmatprep.subr.mxu0 0.0
        %484 = vmatpush1.msra.mxu0 0.0
        %485 = vmatprep.subr.mxu0 0.0
        %486 = vmatpush1.msra.mxu0 0.0
        %487 = vmatprep.subr.mxu0 0.0
        %488 = vmatpush1.msra.mxu0 0.0
        %489 = vmatprep.subr.mxu0 0.0
        %490 = vmatpush1.msra.mxu0 0.0
        %491 = vmatprep.subr.mxu0 0.0
        %492 = vmatpush1.msra.mxu0 0.0
        %493 = vmatprep.subr.mxu0 0.0
        %494 = vmatpush1.msra.mxu0 0.0
        %495 = vmatprep.subr.mxu0 0.0
        %496 = vmatpush1.msra.mxu0 0.0
        %497 = vmatprep.subr.mxu0 0.0
        %498 = vmatpush1.msra.mxu0 0.0
        %499 = vmatprep.subr.mxu0 0.0
        %500 = vmatpush1.msra.mxu0 0.0
        %501 = vmatprep.subr.mxu0 0.0
        %502 = vmatpush1.msra.mxu0 0.0
        %503 = vmatprep.subr.mxu0 0.0
        %504 = vmatpush1.msra.mxu0 0.0
        %505 = vmatprep.subr.mxu0 0.0
        %506 = vmatpush1.msra.mxu0 0.0
        %507 = vmatprep.subr.mxu0 0.0
        %508 = vmatpush1.msra.mxu0 0.0
        %509 = vmatprep.subr.mxu0 0.0
        %510 = vmatpush1.msra.mxu0 %v251
        %511 = vmatprep.subr.mxu0 0.0
        %512 = vmatpush1.msra.mxu0 %v250
        %513 = vmatprep.subr.mxu0 0.0
        %514 = vmatpush2.msra.mxu0 0.0
        %515 = vmatprep.subr.mxu0 0.0
        %516 = vmatpush2.msra.mxu0 0.0
        %517 = vmatprep.subr.mxu0 0.0
        %518 = vmatpush2.msra.mxu0 0.0
        %519 = vmatprep.subr.mxu0 0.0
        %520 = vmatpush2.msra.mxu0 0.0
        %521 = vmatprep.subr.mxu0 0.0
        %522 = vmatpush2.msra.mxu0 0.0
        %523 = vmatprep.subr.mxu0 0.0
        %524 = vmatpush2.msra.mxu0 0.0
        %525 = vmatprep.subr.mxu0 0.0
        %526 = vmatpush2.msra.mxu0 0.0
        %527 = vmatprep.subr.mxu0 0.0
        %528 = vmatpush2.msra.mxu0 0.0
        %529 = vmatprep.subr.mxu0 0.0
        %530 = vmatpush2.msra.mxu0 0.0
        %531 = vmatprep.subr.mxu0 0.0
        %532 = vmatpush2.msra.mxu0 0.0
        %533 = vmatprep.subr.mxu0 0.0
        %534 = vmatpush2.msra.mxu0 0.0
        %535 = vmatprep.subr.mxu0 0.0
        %536 = vmatpush2.msra.mxu0 0.0
        %537 = vmatprep.subr.mxu0 0.0
        %538 = vmatpush2.msra.mxu0 0.0
        %539 = vmatprep.subr.mxu0 0.0
        %540 = vmatpush2.msra.mxu0 0.0
        %541 = vmatprep.subr.mxu0 0.0
        %542 = vmatpush2.msra.mxu0 0.0
        %543 = vmatprep.subr.mxu0 0.0
        %544 = vmatpush2.msra.mxu0 0.0
        %545 = vmatprep.mubr.f32.mxu0 0.0
        %546 = vmatmul.mubr.f32.gmra.mxu0 %v473
        %v547 = vpop.f32.mrf.mxu0
        %v548 = vadd.f32 0.0, %v547
        %v549 = vpop.f32.mrf.mxu0
        %550 = vmatprep.mubr.f32.mxu0 0.0
        %551 = vmatmul.mubr.f32.gmra.mxu0 %v476
        %v552 = vpop.f32.mrf.mxu0
        %v553 = vadd.f32 0.0, %v552
        %v554 = vpop.f32.mrf.mxu0
        %555 = vmatprep.mubr.f32.mxu0 0.0
        %556 = vmatmul.mubr.f32.gmra.mxu0 %v479
        %v557 = vpop.f32.mrf.mxu0
        %v558 = vadd.f32 0.0, %v557
        %v559 = vpop.f32.mrf.mxu0
        %560 = vdwg.mxu0
        %s561 = sld [smem:[#allocation6]]
        %v562 = vstv %s561
        %v563 = vmul.f32 %v562, %v548
        %s564 = sld [smem:[#allocation6 + $0x1]]
        %v565 = vstv %s564
        %v566 = vmul.f32 %v565, %v553
        %v567 = vadd.f32 %v563, %v566
        %s568 = sld [smem:[#allocation6 + $0x2]]
        %v569 = vstv %s568
        %v570 = vmul.f32 %v569, %v558
        %v571 = vadd.f32 %v567, %v570
        %vm572 = vcmask 64512
        %573 = vst.msk [vmem:[%s247] sm:$0xff] %vm572, %v571
        %s574 = sld [smem:[#allocation6 + $0x80]]
        %v575 = vstv %s574
        %v576 = vmul.f32 %v575, %v548
        %s577 = sld [smem:[#allocation6 + $0x81]]
        %v578 = vstv %s577
        %v579 = vmul.f32 %v578, %v553
        %v580 = vadd.f32 %v576, %v579
        %s581 = sld [smem:[#allocation6 + $0x82]]
        %v582 = vstv %s581
        %v583 = vmul.f32 %v582, %v558
        %v584 = vadd.f32 %v580, %v583
        %s585 = scalar_lea.vmem %s247, 8 [#allocation7]
        %586 = vst.msk [vmem:[%s585] sm:$0xff] %vm572, %v584
        %s587 = sld [smem:[#allocation6 + $0x100]]
        %v588 = vstv %s587
        %v589 = vmul.f32 %v588, %v548
        %s590 = sld [smem:[#allocation6 + $0x101]]
        %v591 = vstv %s590
        %v592 = vmul.f32 %v591, %v553
        %v593 = vadd.f32 %v589, %v592
        %s594 = sld [smem:[#allocation6 + $0x102]]
        %v595 = vstv %s594
        %v596 = vmul.f32 %v595, %v558
        %v597 = vadd.f32 %v593, %v596
        %s598 = scalar_lea.vmem %s247, 16 [#allocation7]
        %599 = vst.msk [vmem:[%s598] sm:$0xff] %vm572, %v597
        %s600 = sld [smem:[#allocation6 + $0x180]]
        %v601 = vstv %s600
        %v602 = vmul.f32 %v601, %v548
        %s603 = sld [smem:[#allocation6 + $0x181]]
        %v604 = vstv %s603
        %v605 = vmul.f32 %v604, %v553
        %v606 = vadd.f32 %v602, %v605
        %s607 = sld [smem:[#allocation6 + $0x182]]
        %v608 = vstv %s607
        %v609 = vmul.f32 %v608, %v558
        %v610 = vadd.f32 %v606, %v609
        %s611 = scalar_lea.vmem %s247, 24 [#allocation7]
        %612 = vst.msk [vmem:[%s611] sm:$0xff] %vm572, %v610
        %s613 = sld [smem:[#allocation6 + $0x200]]
        %v614 = vstv %s613
        %v615 = vmul.f32 %v614, %v548
        %s616 = sld [smem:[#allocation6 + $0x201]]
        %v617 = vstv %s616
        %v618 = vmul.f32 %v617, %v553
        %v619 = vadd.f32 %v615, %v618
        %s620 = sld [smem:[#allocation6 + $0x202]]
        %v621 = vstv %s620
        %v622 = vmul.f32 %v621, %v558
        %v623 = vadd.f32 %v619, %v622
        %s624 = scalar_lea.vmem %s247, 32 [#allocation7]
        %625 = vst.msk [vmem:[%s624] sm:$0xff] %vm572, %v623
        %s626 = sld [smem:[#allocation6 + $0x280]]
        %v627 = vstv %s626
        %v628 = vmul.f32 %v627, %v548
        %s629 = sld [smem:[#allocation6 + $0x281]]
        %v630 = vstv %s629
        %v631 = vmul.f32 %v630, %v553
        %v632 = vadd.f32 %v628, %v631
        %s633 = sld [smem:[#allocation6 + $0x282]]
        %v634 = vstv %s633
        %v635 = vmul.f32 %v634, %v558
        %v636 = vadd.f32 %v632, %v635
        %s637 = scalar_lea.vmem %s247, 40 [#allocation7]
        %638 = vst.msk [vmem:[%s637] sm:$0xff] %vm572, %v636
        %s639 = sld [smem:[#allocation6 + $0x300]]
        %v640 = vstv %s639
        %v641 = vmul.f32 %v640, %v548
        %s642 = sld [smem:[#allocation6 + $0x301]]
        %v643 = vstv %s642
        %v644 = vmul.f32 %v643, %v553
        %v645 = vadd.f32 %v641, %v644
        %s646 = sld [smem:[#allocation6 + $0x302]]
        %v647 = vstv %s646
        %v648 = vmul.f32 %v647, %v558
        %v649 = vadd.f32 %v645, %v648
        %s650 = scalar_lea.vmem %s247, 48 [#allocation7]
        %651 = vst.msk [vmem:[%s650] sm:$0xff] %vm572, %v649
        %s652 = sld [smem:[#allocation6 + $0x380]]
        %v653 = vstv %s652
        %v654 = vmul.f32 %v653, %v548
        %s655 = sld [smem:[#allocation6 + $0x381]]
        %v656 = vstv %s655
        %v657 = vmul.f32 %v656, %v553
        %v658 = vadd.f32 %v654, %v657
        %s659 = sld [smem:[#allocation6 + $0x382]]
        %v660 = vstv %s659
        %v661 = vmul.f32 %v660, %v558
        %v662 = vadd.f32 %v658, %v661
        %s663 = scalar_lea.vmem %s247, 56 [#allocation7]
        %664 = vst.msk [vmem:[%s663] sm:$0xff] %vm572, %v662
        %s665 = sand.u32 %s135, 1
        %s666 = scalar_lea.sflag [#allocation4], %s665
        %s667 = sand.u32 %s135, 1
        %s668 = smul.addr %s667, 64
        %s669 = scalar_lea.vmem [#allocation7], %s668
        // Predicated region
        $region45: #{_spatial_rescale.1} parent=35 // pred_check
          %p670 = pneg %p145
        $region46: #{_spatial_rescale.1} parent=35 // pred_check_branch
          %672 = sbr.rel (%p670) target = $region48
        $region47: #{_spatial_rescale.1} parent=35 // pred_region
          %s674 = ssub.s32 1024, 1024
          %675 = vsyncadd %s666, %s674
          %s676 = smul.addr %s26, 8
          %s677 = sadd.s32 %s27, %s676
          %s678 = smul.addr %s677, 128
          %s679 = scalar_lea.hbm %s4, %s678
          %s680 = sshll.u32 %s669, 4
          %s681 = int_to_ptr.vmem [resolvable:$true] %s680
          %686 = dma.vmem_to_hbm [thread:$0]  %s681, 1024, %s679, %s666, 128, 128, 8
        $region48: #{_spatial_rescale.1} parent=35 // pred_fallthru
          _
      $region36: #{_spatial_rescale.1} parent=5 // pred_fallthru
        _
      %p687 = scmp.le.s32.totalorder 2, %s17
      // Predicated region
      $region49: #{_spatial_rescale.1} parent=5 // pred_check
        %p688 = pneg %p687
      $region50: #{_spatial_rescale.1} parent=5 // pred_check_branch
        %690 = sbr.rel (%p688) target = $region52
      $region51: #{_spatial_rescale.1} parent=5 // pred_region
        %s691 = ssub.s32 %s17, 2
        // Predicated region
        $region53: #{_spatial_rescale.1} parent=51 // pred_check
          %p692 = pneg %p151
        $region54: #{_spatial_rescale.1} parent=51 // pred_check_branch
          %694 = sbr.rel (%p692) target = $region56
        $region55: #{_spatial_rescale.1} parent=51 // pred_region
          %s695 = sand.u32 %s136, 1
          %s696 = scalar_lea.sflag [#allocation4], %s695
          %s697 = sand.u32 %s136, 1
          %s698 = smul.addr %s697, 64
          %s699 = scalar_lea.vmem [#allocation7], %s698
          %700 = dma.done %s696, 1024
        $region56: #{_spatial_rescale.1} parent=51 // pred_fallthru
          _
      $region52: #{_spatial_rescale.1} parent=5 // pred_fallthru
        _
    $region6: #{_spatial_rescale.1} parent=1 // loop_footer
      %s21 = sadd.s32 1, %s17
    $region7: #{_spatial_rescale.1} parent=1 // loop_footer_branch
      %16 = sbr.rel target = $region3
    $region8: #{_spatial_rescale.1} parent=1 // loop_exit
      _
    %701 = vsyncpa [#allocation3], 1
    %s702 = scalar_lea.sflag [#allocation3], 1
    %703 = vsyncpa %s702, 1
    %704 = vsyncpa [#allocation4], 1
    %s705 = scalar_lea.sflag [#allocation4], 1
    %706 = vsyncpa %s705, 1
    %707 = vsyncpa [#allocation5], 1
    %s708 = scalar_lea.sflag [#allocation5], 1
    %709 = vsyncpa %s708, 1

</llo_original>
